<compile_context>
chip_gen: v7x
topology: tpu7x:2x2x1
jax: 0.10.0
libtpu: 0.0.40
codegen_flags: <defaults>
</compile_context>

<pallas_src>
import math
import numpy as np

import jax
import jax.numpy as jnp
from jax.experimental import pallas as pl
from jax.experimental.pallas import tpu as pltpu


# ---------------------------------------------------------------------------
# Constants
# ---------------------------------------------------------------------------
MINUTE_SIZE, HOUR_SIZE, WEEKDAY_SIZE, DAY_SIZE, MONTH_SIZE = 4, 24, 7, 32, 13
STACKED_K = 128                  # stacked table rows padded to 128
_PAD_SENTINEL = -(1 << 20)       # padded index rows never match any table row
_VMEM_BUDGET = 40 * 1024 * 1024  # per-step buffer budget (safe on v7x 64 MiB)
_VMEM_LIMIT = 48 * 1024 * 1024   # scoped VMEM limit handed to Mosaic


def _round_up(n: int, m: int) -> int:
    return ((n + m - 1) // m) * m


def _cdiv(a: int, b: int) -> int:
    return (a + b - 1) // b


# ---------------------------------------------------------------------------
# Parameter construction (deterministic, mirrors FixedEmbedding.__init__)
# ---------------------------------------------------------------------------
def fixed_embedding_table(c_in: int, d_model: int) -> np.ndarray:
    assert d_model % 2 == 0, "FixedEmbedding assumes even d_model (as in the PyTorch code)"
    pos = np.arange(c_in, dtype=np.float32)[:, None]
    div = np.exp(
        np.arange(0, d_model, 2, dtype=np.float32) * -(math.log(10000.0) / d_model)
    )
    w = np.zeros((c_in, d_model), dtype=np.float32)
    w[:, 0::2] = np.sin(pos * div)
    w[:, 1::2] = np.cos(pos * div)
    return w


def build_temporal_tables(d_model: int, freq: str = "h"):
    tables = {
        "month": jnp.asarray(fixed_embedding_table(MONTH_SIZE, d_model)),
        "day": jnp.asarray(fixed_embedding_table(DAY_SIZE, d_model)),
        "weekday": jnp.asarray(fixed_embedding_table(WEEKDAY_SIZE, d_model)),
        "hour": jnp.asarray(fixed_embedding_table(HOUR_SIZE, d_model)),
    }
    if freq == "t":
        tables["minute"] = jnp.asarray(fixed_embedding_table(MINUTE_SIZE, d_model))
    return tables


def build_stacked_table(tables, freq: str = "h", n_terms: int = 3):
    """Stack the per-feature tables row-wise (column order [month, day,
    weekday, hour, (minute)]), pad to (128, d_pad) with d_pad a multiple of
    128, and split into `n_terms` bf16 terms (hi / mid / lo residuals).

    Returns (table_terms[n_terms,128,d_pad] bf16, offsets, d_model, d_pad).
    """
    assert 1 <= n_terms <= 3
    order = ["month", "day", "weekday", "hour"] + (["minute"] if freq == "t" else [])
    sizes = {"month": MONTH_SIZE, "day": DAY_SIZE, "weekday": WEEKDAY_SIZE,
             "hour": HOUR_SIZE, "minute": MINUTE_SIZE}
    parts, offsets, off = [], [], 0
    for name in order:
        parts.append(np.asarray(tables[name], dtype=np.float32))
        offsets.append(off)
        off += sizes[name]
    stacked = np.concatenate(parts, axis=0)                       # (76|80, d_model)
    d_model = stacked.shape[1]
    d_pad = _round_up(max(d_model, 128), 128)                     # lane-dense output
    stacked = np.pad(stacked, ((0, STACKED_K - stacked.shape[0]),
                               (0, d_pad - d_model)))             # (128, d_pad)

    # bf16 hi/mid/lo split: the multi-hot mask is exactly 0/1 in bf16, so the
    # sum of the per-term bf16 matmuls (f32 accumulation) reconstructs the f32
    # table values to ~2^-(9*n_terms) relative error (~1e-7 for 3 terms) while
    # keeping every MXU pass native bf16.
    resid = jnp.asarray(stacked, dtype=jnp.float32)
    terms = []
    for _ in range(n_terms):
        t = resid.astype(jnp.bfloat16)
        terms.append(t)
        resid = resid - t.astype(jnp.float32)
    table = jnp.stack(terms, axis=0)                              # (n_terms, 128, d_pad)
    return table, tuple(int(o) for o in offsets), d_model, d_pad


# ---------------------------------------------------------------------------
# Pallas kernel: one multi-hot mask + n_terms bf16 MXU matmuls per tile
# ---------------------------------------------------------------------------
def _make_kernel(offsets):
    offs = tuple(int(o) for o in offsets)   # compile-time constants, folded in

    def kernel(idx_ref, table_ref, out_ref):
        idx = idx_ref[...]                                   # (TN, F) int32
        tn = idx.shape[0]
        k = table_ref.shape[1]                               # STACKED_K (=128)

        # Single hoisted iota, boolean OR of the F disjoint-range compares,
        # one convert to bf16 at the end.
        iota = jax.lax.broadcasted_iota(jnp.int32, (tn, k), 1)
        col = idx[:, 0:1] + offs[0] if offs[0] else idx[:, 0:1]
        hit = col == iota
        for c in range(1, idx.shape[1]):                      # F is static
            col = idx[:, c:c + 1] + offs[c] if offs[c] else idx[:, c:c + 1]
            hit = jnp.logical_or(hit, col == iota)
        mask = hit.astype(jnp.bfloat16)                       # exact 0/1 in bf16

        # One native bf16 K=128 MXU matmul per table term, f32 accumulation.
        acc = jnp.dot(mask, table_ref[0], preferred_element_type=jnp.float32)
        for t in range(1, table_ref.shape[0]):
            acc = acc + jnp.dot(mask, table_ref[t],
                                preferred_element_type=jnp.float32)
        out_ref[...] = acc.astype(out_ref.dtype)

    return kernel


# ---------------------------------------------------------------------------
# Wrapper
# ---------------------------------------------------------------------------
def _col_tile(d_pad: int, cap: int) -> int:
    """Largest multiple-of-128 divisor of d_pad that is <= cap."""
    if d_pad <= cap:
        return d_pad
    for t in range(cap - cap % 128, 127, -128):
        if d_pad % t == 0:
            return t
    return 128


def _vmem_estimate(tile_r: int, tile_c: int, n_terms: int, out_bytes: int) -> int:
    out_buf = 2 * tile_r * tile_c * out_bytes        # double-buffered output
    idx_buf = 2 * tile_r * 128 * 4                   # int32 idx, lane-padded 4->128
    tab_buf = 2 * n_terms * STACKED_K * tile_c * 2   # bf16 table terms
    tmp = tile_r * tile_c * 4 + tile_r * 128 * 4     # f32 acc + mask temporaries
    return out_buf + idx_buf + tab_buf + tmp


def temporal_embedding(x, tables, *, freq: str = "h", tile_rows: int = 2048,
                       n_table_terms: int = 3, out_dtype=jnp.float32,
                       max_col_tile: int = 1024):
    """x: int array [B, L, F]; returns [B, L, d_model] in `out_dtype`.

    n_table_terms: 3 -> ~f32 accuracy (default), 1 -> fast single-bf16 path.
    out_dtype: jnp.float32 (default) or jnp.bfloat16 (halves HBM writeback).
    NOTE: indices must be in-range for their feature (as nn.Embedding requires);
    out-of-range indices would silently alias another feature's row.
    """
    use_minute = freq == "t"
    n_cols = 5 if use_minute else 4
    B, L, F = x.shape
    assert F >= n_cols

    table, offsets, d_model, d_pad = build_stacked_table(
        tables, freq=freq, n_terms=n_table_terms)

    N = B * L
    idx = x.reshape(N, F)[:, :n_cols].astype(jnp.int32)   # offsets folded in-kernel

    # Column tile (only splits for very wide d_model; keeps out_spec lane-dense).
    tile_c = _col_tile(d_pad, max_col_tile)

    # Row tile: multiple of 8, >=2 row blocks when there is enough work
    # (megacore / v7x 2-TC sharding), clamped to the VMEM budget.
    out_bytes = np.dtype(out_dtype).itemsize
    tile = max(8, _round_up(min(tile_rows, _round_up(N, 8)), 8))
    if N >= 1024 and _cdiv(N, tile) < 2:
        tile = _round_up(_cdiv(N, 2), 8)
    while tile > 256 and _vmem_estimate(tile, tile_c, n_table_terms, out_bytes) > _VMEM_BUDGET:
        tile = _round_up(tile // 2, 8)

    Np = _cdiv(N, tile) * tile
    if Np > N:
        # Sentinel pad: never matches any stacked-table row even after the
        # in-kernel offset add -> zero rows (sliced off below anyway).
        idx = jnp.pad(idx, ((0, Np - N), (0, 0)), constant_values=_PAD_SENTINEL)

    grid = (Np // tile, d_pad // tile_c)
    out = pl.pallas_call(
        _make_kernel(offsets),
        out_shape=jax.ShapeDtypeStruct((Np, d_pad), out_dtype),
        grid_spec=pltpu.PrefetchScalarGridSpec(
            num_scalar_prefetch=0,
            grid=grid,
            in_specs=[
                pl.BlockSpec((tile, n_cols), lambda i, j: (i, 0)),
                pl.BlockSpec((n_table_terms, STACKED_K, tile_c),
                             lambda i, j: (0, 0, j)),
            ],
            out_specs=pl.BlockSpec((tile, tile_c), lambda i, j: (i, j)),
        ),
        compiler_params=pltpu.CompilerParams(
            dimension_semantics=("parallel", "parallel"),
            vmem_limit_bytes=_VMEM_LIMIT),
    )(idx, table)

    return out[:N, :d_model].reshape(B, L, d_model)


# ---------------------------------------------------------------------------
# Pure-JAX reference (matches the PyTorch forward)
# ---------------------------------------------------------------------------
def temporal_embedding_ref(x, tables, *, freq: str = "h"):
    x = x.astype(jnp.int32)
    out = (tables["hour"][x[:, :, 3]]
           + tables["weekday"][x[:, :, 2]]
           + tables["day"][x[:, :, 1]]
           + tables["month"][x[:, :, 0]])
    if freq == "t":
        out = out + tables["minute"][x[:, :, 4]]
    return out


if __name__ == "__main__":
    B, L, d_model = 2, 8, 32
    freq = "h"            # default TemporalEmbedding config (embed_type='fixed')

    key = jax.random.PRNGKey(0)
    k_m, k_d, k_w, k_h = jax.random.split(key, 4)
    x = jnp.stack(
        [
            jax.random.randint(k_m, (B, L), 0, MONTH_SIZE),
            jax.random.randint(k_d, (B, L), 0, DAY_SIZE),
            jax.random.randint(k_w, (B, L), 0, WEEKDAY_SIZE),
            jax.random.randint(k_h, (B, L), 0, HOUR_SIZE),
        ],
        axis=-1,
    ).astype(jnp.int32)    # [B, L, 4] = [month, day, weekday, hour]

    tables = build_temporal_tables(d_model, freq=freq)
    ref = temporal_embedding_ref(x, tables, freq=freq)

    # High-accuracy path (3-term bf16 split, f32 output) — matches f32 at 1e-5.
    out = temporal_embedding(x, tables, freq=freq)
    out = jax.block_until_ready(out)
    if not np.allclose(np.asarray(out), np.asarray(ref), atol=1e-5, rtol=1e-5):
        raise AssertionError("Pallas kernel output does not match reference (high-accuracy path)")

    # Fast path (single bf16 table term, bf16 output) — relaxed tolerance.
    out_fast = temporal_embedding(x, tables, freq=freq,
                                  n_table_terms=1, out_dtype=jnp.bfloat16)
    out_fast = jax.block_until_ready(out_fast)
    if not np.allclose(np.asarray(out_fast.astype(jnp.float32)), np.asarray(ref),
                       atol=5e-2, rtol=5e-2):
        raise AssertionError("Pallas kernel output does not match reference (fast bf16 path)")

    print("KERNEL_OK")
</pallas_src>

<mosaic_0001>
module attributes {stable_mosaic.version = 11 : i64} {
  func.func @kernel(%arg0: i32, %arg1: i32, %arg2: memref<16x4xi32, #tpu.memory_space<vmem>>, %arg3: memref<3x128x128xbf16, #tpu.memory_space<vmem>>, %arg4: memref<16x128xf32, #tpu.memory_space<vmem>>) attributes {dimension_semantics = [#tpu.dimension_semantics<parallel>, #tpu.dimension_semantics<parallel>], iteration_bounds = array<i64: 1, 1>, scalar_prefetch = 0 : i64, scratch_operands = 0 : i64, tpu.core_type = #tpu.core_type<tc>, window_params = [{transform_indices = @transform_0, window_bounds = array<i64: 16, 4>}, {transform_indices = @transform_1, window_bounds = array<i64: 3, 128, 128>}, {transform_indices = @transform_2, window_bounds = array<i64: 16, 128>}]} {
    %c0 = arith.constant 0 : index
    %c0_0 = arith.constant 0 : index
    %0 = vector.load %arg2[%c0, %c0_0] : memref<16x4xi32, #tpu.memory_space<vmem>>, vector<16x4xi32>
    %1 = tpu.iota {dimensions = array<i32: 1>} : vector<16x128xi32>
    %2 = vector.extract_strided_slice %0 {offsets = [0, 0], sizes = [16, 1], strides = [1, 1]} : vector<16x4xi32> to vector<16x1xi32>
    %3 = vector.broadcast %2 : vector<16x1xi32> to vector<16x128xi32>
    %4 = arith.cmpi eq, %3, %1 : vector<16x128xi32>
    %5 = vector.extract_strided_slice %0 {offsets = [0, 1], sizes = [16, 1], strides = [1, 1]} : vector<16x4xi32> to vector<16x1xi32>
    %c13_i32 = arith.constant 13 : i32
    %6 = vector.broadcast %c13_i32 : i32 to vector<16x1xi32>
    %7 = arith.addi %5, %6 : vector<16x1xi32>
    %8 = vector.broadcast %7 : vector<16x1xi32> to vector<16x128xi32>
    %9 = arith.cmpi eq, %8, %1 : vector<16x128xi32>
    %10 = arith.ori %4, %9 : vector<16x128xi1>
    %11 = vector.extract_strided_slice %0 {offsets = [0, 2], sizes = [16, 1], strides = [1, 1]} : vector<16x4xi32> to vector<16x1xi32>
    %c45_i32 = arith.constant 45 : i32
    %12 = vector.broadcast %c45_i32 : i32 to vector<16x1xi32>
    %13 = arith.addi %11, %12 : vector<16x1xi32>
    %14 = vector.broadcast %13 : vector<16x1xi32> to vector<16x128xi32>
    %15 = arith.cmpi eq, %14, %1 : vector<16x128xi32>
    %16 = arith.ori %10, %15 : vector<16x128xi1>
    %17 = vector.extract_strided_slice %0 {offsets = [0, 3], sizes = [16, 1], strides = [1, 1]} : vector<16x4xi32> to vector<16x1xi32>
    %c52_i32 = arith.constant 52 : i32
    %18 = vector.broadcast %c52_i32 : i32 to vector<16x1xi32>
    %19 = arith.addi %17, %18 : vector<16x1xi32>
    %20 = vector.broadcast %19 : vector<16x1xi32> to vector<16x128xi32>
    %21 = arith.cmpi eq, %20, %1 : vector<16x128xi32>
    %22 = arith.ori %16, %21 : vector<16x128xi1>
    %23 = arith.extui %22 : vector<16x128xi1> to vector<16x128xi32>
    %24 = arith.sitofp %23 : vector<16x128xi32> to vector<16x128xf32>
    %25 = arith.truncf %24 : vector<16x128xf32> to vector<16x128xbf16>
    %c0_1 = arith.constant 0 : index
    %c0_2 = arith.constant 0 : index
    %c0_3 = arith.constant 0 : index
    %26 = vector.load %arg3[%c0_1, %c0_2, %c0_3] : memref<3x128x128xbf16, #tpu.memory_space<vmem>>, vector<1x128x128xbf16>
    %27 = vector.shape_cast %26 : vector<1x128x128xbf16> to vector<128x128xbf16>
    %cst = arith.constant dense<0.000000e+00> : vector<16x128xf32>
    %28 = tpu.matmul %25, %27, %cst {dimension_numbers = #tpu.dot_dimension_numbers<[1], [0], [0], [1], [0, 0, 1, 1], [], []>} : vector<16x128xbf16>, vector<128x128xbf16>, vector<16x128xf32> -> vector<16x128xf32>
    %c1 = arith.constant 1 : index
    %c0_4 = arith.constant 0 : index
    %c0_5 = arith.constant 0 : index
    %29 = vector.load %arg3[%c1, %c0_4, %c0_5] : memref<3x128x128xbf16, #tpu.memory_space<vmem>>, vector<1x128x128xbf16>
    %30 = vector.shape_cast %29 : vector<1x128x128xbf16> to vector<128x128xbf16>
    %cst_6 = arith.constant dense<0.000000e+00> : vector<16x128xf32>
    %31 = tpu.matmul %25, %30, %cst_6 {dimension_numbers = #tpu.dot_dimension_numbers<[1], [0], [0], [1], [0, 0, 1, 1], [], []>} : vector<16x128xbf16>, vector<128x128xbf16>, vector<16x128xf32> -> vector<16x128xf32>
    %32 = arith.addf %28, %31 : vector<16x128xf32>
    %c2 = arith.constant 2 : index
    %c0_7 = arith.constant 0 : index
    %c0_8 = arith.constant 0 : index
    %33 = vector.load %arg3[%c2, %c0_7, %c0_8] : memref<3x128x128xbf16, #tpu.memory_space<vmem>>, vector<1x128x128xbf16>
    %34 = vector.shape_cast %33 : vector<1x128x128xbf16> to vector<128x128xbf16>
    %cst_9 = arith.constant dense<0.000000e+00> : vector<16x128xf32>
    %35 = tpu.matmul %25, %34, %cst_9 {dimension_numbers = #tpu.dot_dimension_numbers<[1], [0], [0], [1], [0, 0, 1, 1], [], []>} : vector<16x128xbf16>, vector<128x128xbf16>, vector<16x128xf32> -> vector<16x128xf32>
    %36 = arith.addf %32, %35 : vector<16x128xf32>
    %c0_10 = arith.constant 0 : index
    %c0_11 = arith.constant 0 : index
    %37 = vector.load %arg4[%c0_10, %c0_11] : memref<16x128xf32, #tpu.memory_space<vmem>>, vector<16x128xf32>
    tpu.vector_store %arg4[%c0_10, %c0_11], %36 {strides = array<i32>} : memref<16x128xf32, #tpu.memory_space<vmem>>, vector<16x128xf32>,
    return
  }
  func.func @transform_0(%arg0: i32, %arg1: i32) -> (i32, i32) {
    %c0_i32 = arith.constant 0 : i32
    %c0_i32_0 = arith.constant 0 : i32
    return %arg0, %c0_i32 : i32, i32
  }
  func.func @transform_1(%arg0: i32, %arg1: i32) -> (i32, i32, i32) {
    %c0_i32 = arith.constant 0 : i32
    %c0_i32_0 = arith.constant 0 : i32
    %c0_i32_1 = arith.constant 0 : i32
    return %c0_i32, %c0_i32_0, %arg1 : i32, i32, i32
  }
  func.func @transform_2(%arg0: i32, %arg1: i32) -> (i32, i32) {
    %c0_i32 = arith.constant 0 : i32
    return %arg0, %arg1 : i32, i32
  }
}

</mosaic_0001>

<llo_original>
// kernel: tpu_custom_call.1
$region0: #{tpu_custom_call.1}
  #allocation0 [shape = 'u32[]', space=smem, size = 0x4, offset = 0x4, fixed_abs, tag = 'smem constant byte address 0x4 - core index']
  #allocation1 [shape = 'u32[144,128]{1,0:T(1,128)}', space=vmem, size = 0x12000, scoped, tag = 'internal scratch']
  %s0 = inlined_call_operand.vmem [shape: s32[16,4], index: 0, kind: input, shape index: {}]
  %s1 = inlined_call_operand.hbm [shape: bf16[3,128,128], index: 1, kind: input, shape index: {}]
  %s2 = inlined_call_operand.hbm [shape: f32[16,128], index: 2, kind: output, shape index: {}]
  %s3 = sld [smem:[#allocation0]]
  $region22: #{tpu_custom_call.1} parent=0
    _
  %s5 = ssub.s32 1, %s3
  %s6 = scalar_select 0, %s5, %s3
  $region1: #{tpu_custom_call.1} parent=0
    #allocation2 [shape = 'u8[98304]{0}', space=vmem, size = 0x18000, scoped, tag = 'input window, operand 1, single buffered']
    #allocation3 [shape = 's32[1]{0}', space=sflag, size = 0x4, scoped, tag = 'scoped memory for tpu_custom_call.1']
    #allocation4 [shape = 's32[1]{0}', space=sflag, size = 0x4, scoped, tag = 'scoped memory for tpu_custom_call.1']
    #allocation5 [shape = 'u8[8192]{0}', space=vmem, size = 0x2000, scoped, tag = 'output window, operand 0, single buffered']
    %7 = vsyncpa [#allocation3], 0
    %8 = vsyncpa [#allocation4], 0
    // Predicated region
    $region2: #{tpu_custom_call.1} parent=1 // pred_check
      _
    $region3: #{tpu_custom_call.1} parent=1 // pred_check_branch
      %10 = sbr.rel (0) target = $region5
    $region4: #{tpu_custom_call.1} parent=1 // pred_region
      _
    $region5: #{tpu_custom_call.1} parent=1 // pred_fallthru
      _
    // Predicated region
    $region6: #{tpu_custom_call.1} parent=1 // pred_check
      _
    $region7: #{tpu_custom_call.1} parent=1 // pred_check_branch
      %12 = sbr.rel (0) target = $region9
    $region8: #{tpu_custom_call.1} parent=1 // pred_region
      %s14 = ssub.s32 3072, 3072
      %15 = vsyncadd [#allocation3], %s14
      %s16 = sshll.u32 [#allocation2], 4
      %s17 = int_to_ptr.vmem [resolvable:$true] %s16
      %22 = dma.hbm_to_vmem [thread:$0]  %s1, 3072, %s17, [#allocation3], 64, 64, 4
    $region9: #{tpu_custom_call.1} parent=1 // pred_fallthru
      _
    // Predicated region
    $region10: #{tpu_custom_call.1} parent=1 // pred_check
      _
    $region11: #{tpu_custom_call.1} parent=1 // pred_check_branch
      %24 = sbr.rel (0) target = $region13
    $region12: #{tpu_custom_call.1} parent=1 // pred_region
      %25 = dma.done [#allocation3], 3072
    $region13: #{tpu_custom_call.1} parent=1 // pred_fallthru
      _
    %v27 = vld [vmem:[%s0] sm:$0xff]
    %v28 = vld [vmem:[%s0 + $0x8] sm:$0xff]
    %v29 = vlaneseq
    %v30 = vand.u32 %v29, 127
    %31 = vset.pattern.permute.xlu0 0
    %32 = vperm.xlu0 %31, %v27
    %v33 = vpop.permute.xlu0 %32
    %34 = vset.pattern.permute.xlu0 0
    %35 = vperm.xlu0 %34, %v28
    %v36 = vpop.permute.xlu0 %35
    %vm37 = vcmp.eq.s32.totalorder %v33, %v30
    %vm38 = vcmp.eq.s32.totalorder %v36, %v30
    %v39 = vadd.s32 %v27, 13
    %v40 = vadd.s32 %v28, 13
    %41 = vset.pattern.permute.xlu0 1
    %42 = vperm.xlu0 %41, %v39
    %v43 = vpop.permute.xlu0 %42
    %44 = vset.pattern.permute.xlu0 1
    %45 = vperm.xlu0 %44, %v40
    %v46 = vpop.permute.xlu0 %45
    %vm47 = vcmp.eq.s32.totalorder %v43, %v30
    %vm48 = vcmp.eq.s32.totalorder %v46, %v30
    %vm49 = vmor %vm37, %vm47
    %vm50 = vmor %vm38, %vm48
    %v51 = vadd.s32 %v27, 45
    %v52 = vadd.s32 %v28, 45
    %53 = vset.pattern.permute.xlu0 2
    %54 = vperm.xlu0 %53, %v51
    %v55 = vpop.permute.xlu0 %54
    %56 = vset.pattern.permute.xlu0 2
    %57 = vperm.xlu0 %56, %v52
    %v58 = vpop.permute.xlu0 %57
    %vm59 = vcmp.eq.s32.totalorder %v55, %v30
    %vm60 = vcmp.eq.s32.totalorder %v58, %v30
    %vm61 = vmor %vm49, %vm59
    %vm62 = vmor %vm50, %vm60
    %v63 = vadd.s32 %v27, 52
    %v64 = vadd.s32 %v28, 52
    %65 = vset.pattern.permute.xlu0 3
    %66 = vperm.xlu0 %65, %v63
    %v67 = vpop.permute.xlu0 %66
    %68 = vset.pattern.permute.xlu0 3
    %69 = vperm.xlu0 %68, %v64
    %v70 = vpop.permute.xlu0 %69
    %vm71 = vcmp.eq.s32.totalorder %v67, %v30
    %vm72 = vcmp.eq.s32.totalorder %v70, %v30
    %vm73 = vmor %vm61, %vm71
    %vm74 = vmor %vm62, %vm72
    %v75 = vsel %vm73, 1, 0
    %v76 = vsel %vm74, 1, 0
    %v77 = vcvt.s32.f32 %v75
    %v78 = vcvt.s32.f32 %v76
    %v79 = vpack.c.bf16 %v78, %v77
    %v80 = vld [vmem:[#allocation2] sm:$0xf]
    %v81 = vld [vmem:[#allocation2 + $0x4] sm:$0xf]
    %v82 = vld [vmem:[#allocation2 + $0x8] sm:$0xf]
    %v83 = vld [vmem:[#allocation2 + $0xc] sm:$0xf]
    %v84 = vld [vmem:[#allocation2 + $0x10] sm:$0xf]
    %v85 = vld [vmem:[#allocation2 + $0x14] sm:$0xf]
    %v86 = vld [vmem:[#allocation2 + $0x18] sm:$0xf]
    %v87 = vld [vmem:[#allocation2 + $0x1c] sm:$0xf]
    %v88 = vld [vmem:[#allocation2 + $0x20] sm:$0xf]
    %v89 = vld [vmem:[#allocation2 + $0x24] sm:$0xf]
    %v90 = vld [vmem:[#allocation2 + $0x28] sm:$0xf]
    %v91 = vld [vmem:[#allocation2 + $0x2c] sm:$0xf]
    %v92 = vld [vmem:[#allocation2 + $0x30] sm:$0xf]
    %v93 = vld [vmem:[#allocation2 + $0x34] sm:$0xf]
    %v94 = vld [vmem:[#allocation2 + $0x38] sm:$0xf]
    %v95 = vld [vmem:[#allocation2 + $0x3c] sm:$0xf]
    %s96 = scalar_lea.vmem [#allocation2], 64
    %v97 = vld [vmem:[%s96] sm:$0xf]
    %v98 = vld [vmem:[%s96 + $0x4] sm:$0xf]
    %v99 = vld [vmem:[%s96 + $0x8] sm:$0xf]
    %v100 = vld [vmem:[%s96 + $0xc] sm:$0xf]
    %v101 = vld [vmem:[%s96 + $0x10] sm:$0xf]
    %v102 = vld [vmem:[%s96 + $0x14] sm:$0xf]
    %v103 = vld [vmem:[%s96 + $0x18] sm:$0xf]
    %v104 = vld [vmem:[%s96 + $0x1c] sm:$0xf]
    %v105 = vld [vmem:[%s96 + $0x20] sm:$0xf]
    %v106 = vld [vmem:[%s96 + $0x24] sm:$0xf]
    %v107 = vld [vmem:[%s96 + $0x28] sm:$0xf]
    %v108 = vld [vmem:[%s96 + $0x2c] sm:$0xf]
    %v109 = vld [vmem:[%s96 + $0x30] sm:$0xf]
    %v110 = vld [vmem:[%s96 + $0x34] sm:$0xf]
    %v111 = vld [vmem:[%s96 + $0x38] sm:$0xf]
    %v112 = vld [vmem:[%s96 + $0x3c] sm:$0xf]
    %v129 = vunpack.c.l.b16 %v97
    %v130 = vunpack.c.l.b16 %v98
    %v131 = vunpack.c.l.b16 %v99
    %v132 = vunpack.c.l.b16 %v100
    %v133 = vunpack.c.l.b16 %v101
    %v134 = vunpack.c.l.b16 %v102
    %v135 = vunpack.c.l.b16 %v103
    %v136 = vunpack.c.l.b16 %v104
    %v137 = vunpack.c.l.b16 %v105
    %v138 = vunpack.c.l.b16 %v106
    %v139 = vunpack.c.l.b16 %v107
    %v140 = vunpack.c.l.b16 %v108
    %v141 = vunpack.c.l.b16 %v109
    %v142 = vunpack.c.l.b16 %v110
    %v143 = vunpack.c.l.b16 %v111
    %v144 = vunpack.c.l.b16 %v112
    %v145 = vpack.c.b16 %v130, %v129
    %v146 = vpack.c.b16 %v132, %v131
    %v147 = vpack.c.b16 %v134, %v133
    %v148 = vpack.c.b16 %v136, %v135
    %v149 = vpack.c.b16 %v138, %v137
    %v150 = vpack.c.b16 %v140, %v139
    %v151 = vpack.c.b16 %v142, %v141
    %v152 = vpack.c.b16 %v144, %v143
    %161 = vmatprep.subr.bf16.mxu0 0
    %162 = vmatpush1.bf16.msra.mxu0 %v145
    %163 = vmatprep.subr.bf16.mxu0 0
    %164 = vmatpush1.bf16.msra.mxu0 %v146
    %165 = vmatprep.subr.bf16.mxu0 0
    %166 = vmatpush1.bf16.msra.mxu0 %v147
    %167 = vmatprep.subr.bf16.mxu0 0
    %168 = vmatpush1.bf16.msra.mxu0 %v148
    %169 = vmatprep.subr.bf16.mxu0 0
    %170 = vmatpush1.bf16.msra.mxu0 %v149
    %171 = vmatprep.subr.bf16.mxu0 0
    %172 = vmatpush1.bf16.msra.mxu0 %v150
    %173 = vmatprep.subr.bf16.mxu0 0
    %174 = vmatpush1.bf16.msra.mxu0 %v151
    %175 = vmatprep.subr.bf16.mxu0 0
    %176 = vmatpush1.bf16.msra.mxu0 %v152
    %177 = vmatprep.subr.bf16.mxu0 0
    %178 = vmatpush1.bf16.msra.mxu0 0
    %179 = vmatprep.subr.bf16.mxu0 0
    %180 = vmatpush1.bf16.msra.mxu0 0
    %181 = vmatprep.subr.bf16.mxu0 0
    %182 = vmatpush1.bf16.msra.mxu0 0
    %183 = vmatprep.subr.bf16.mxu0 0
    %184 = vmatpush1.bf16.msra.mxu0 0
    %185 = vmatprep.subr.bf16.mxu0 0
    %186 = vmatpush1.bf16.msra.mxu0 0
    %187 = vmatprep.subr.bf16.mxu0 0
    %188 = vmatpush1.bf16.msra.mxu0 0
    %189 = vmatprep.subr.bf16.mxu0 0
    %190 = vmatpush1.bf16.msra.mxu0 0
    %191 = vmatprep.subr.bf16.mxu0 0
    %192 = vmatpush1.bf16.msra.mxu0 0
    %193 = vmatprep.mubr.bf16.mxu0 0
    %194 = vmatmul.mubr.bf16.gmra.mrb[0].mxu0 %v79
    %v195 = vpop.f32.mrb[0].mxu0
    %v196 = vadd.f32 0.0, %v195
    %v197 = vpop.f32.mrb[0].mxu0
    %v198 = vpop.f32.mrb[0].mxu0
    %v199 = vadd.f32 0.0, %v198
    %v200 = vpop.f32.mrb[0].mxu0
    %201 = vdwg.mxu0
    %v218 = vunpack.c.l.b16 %v80
    %v219 = vunpack.c.l.b16 %v81
    %v220 = vunpack.c.l.b16 %v82
    %v221 = vunpack.c.l.b16 %v83
    %v222 = vunpack.c.l.b16 %v84
    %v223 = vunpack.c.l.b16 %v85
    %v224 = vunpack.c.l.b16 %v86
    %v225 = vunpack.c.l.b16 %v87
    %v226 = vunpack.c.l.b16 %v88
    %v227 = vunpack.c.l.b16 %v89
    %v228 = vunpack.c.l.b16 %v90
    %v229 = vunpack.c.l.b16 %v91
    %v230 = vunpack.c.l.b16 %v92
    %v231 = vunpack.c.l.b16 %v93
    %v232 = vunpack.c.l.b16 %v94
    %v233 = vunpack.c.l.b16 %v95
    %v234 = vpack.c.b16 %v219, %v218
    %v235 = vpack.c.b16 %v221, %v220
    %v236 = vpack.c.b16 %v223, %v222
    %v237 = vpack.c.b16 %v225, %v224
    %v238 = vpack.c.b16 %v227, %v226
    %v239 = vpack.c.b16 %v229, %v228
    %v240 = vpack.c.b16 %v231, %v230
    %v241 = vpack.c.b16 %v233, %v232
    %250 = vmatprep.subr.bf16.mxu0 0
    %251 = vmatpush1.bf16.msra.mxu0 %v234
    %252 = vmatprep.subr.bf16.mxu0 0
    %253 = vmatpush1.bf16.msra.mxu0 %v235
    %254 = vmatprep.subr.bf16.mxu0 0
    %255 = vmatpush1.bf16.msra.mxu0 %v236
    %256 = vmatprep.subr.bf16.mxu0 0
    %257 = vmatpush1.bf16.msra.mxu0 %v237
    %258 = vmatprep.subr.bf16.mxu0 0
    %259 = vmatpush1.bf16.msra.mxu0 %v238
    %260 = vmatprep.subr.bf16.mxu0 0
    %261 = vmatpush1.bf16.msra.mxu0 %v239
    %262 = vmatprep.subr.bf16.mxu0 0
    %263 = vmatpush1.bf16.msra.mxu0 %v240
    %264 = vmatprep.subr.bf16.mxu0 0
    %265 = vmatpush1.bf16.msra.mxu0 %v241
    %266 = vmatprep.subr.bf16.mxu0 0
    %267 = vmatpush1.bf16.msra.mxu0 0
    %268 = vmatprep.subr.bf16.mxu0 0
    %269 = vmatpush1.bf16.msra.mxu0 0
    %270 = vmatprep.subr.bf16.mxu0 0
    %271 = vmatpush1.bf16.msra.mxu0 0
    %272 = vmatprep.subr.bf16.mxu0 0
    %273 = vmatpush1.bf16.msra.mxu0 0
    %274 = vmatprep.subr.bf16.mxu0 0
    %275 = vmatpush1.bf16.msra.mxu0 0
    %276 = vmatprep.subr.bf16.mxu0 0
    %277 = vmatpush1.bf16.msra.mxu0 0
    %278 = vmatprep.subr.bf16.mxu0 0
    %279 = vmatpush1.bf16.msra.mxu0 0
    %280 = vmatprep.subr.bf16.mxu0 0
    %281 = vmatpush1.bf16.msra.mxu0 0
    %282 = vmatprep.mubr.bf16.mxu0 0
    %283 = vmatmul.mubr.bf16.gmra.mrb[0].mxu0 %v79
    %v284 = vpop.f32.mrb[0].mxu0
    %v285 = vadd.f32 %v196, %v284
    %v286 = vpop.f32.mrb[0].mxu0
    %v287 = vpop.f32.mrb[0].mxu0
    %v288 = vadd.f32 %v199, %v287
    %v289 = vpop.f32.mrb[0].mxu0
    %290 = vdwg.mxu0
    %s291 = scalar_lea.vmem [#allocation2], 128
    %v292 = vld [vmem:[%s291] sm:$0xf]
    %v293 = vld [vmem:[%s291 + $0x4] sm:$0xf]
    %v294 = vld [vmem:[%s291 + $0x8] sm:$0xf]
    %v295 = vld [vmem:[%s291 + $0xc] sm:$0xf]
    %v296 = vld [vmem:[%s291 + $0x10] sm:$0xf]
    %v297 = vld [vmem:[%s291 + $0x14] sm:$0xf]
    %v298 = vld [vmem:[%s291 + $0x18] sm:$0xf]
    %v299 = vld [vmem:[%s291 + $0x1c] sm:$0xf]
    %v300 = vld [vmem:[%s291 + $0x20] sm:$0xf]
    %v301 = vld [vmem:[%s291 + $0x24] sm:$0xf]
    %v302 = vld [vmem:[%s291 + $0x28] sm:$0xf]
    %v303 = vld [vmem:[%s291 + $0x2c] sm:$0xf]
    %v304 = vld [vmem:[%s291 + $0x30] sm:$0xf]
    %v305 = vld [vmem:[%s291 + $0x34] sm:$0xf]
    %v306 = vld [vmem:[%s291 + $0x38] sm:$0xf]
    %v307 = vld [vmem:[%s291 + $0x3c] sm:$0xf]
    %v324 = vunpack.c.l.b16 %v292
    %v325 = vunpack.c.l.b16 %v293
    %v326 = vunpack.c.l.b16 %v294
    %v327 = vunpack.c.l.b16 %v295
    %v328 = vunpack.c.l.b16 %v296
    %v329 = vunpack.c.l.b16 %v297
    %v330 = vunpack.c.l.b16 %v298
    %v331 = vunpack.c.l.b16 %v299
    %v332 = vunpack.c.l.b16 %v300
    %v333 = vunpack.c.l.b16 %v301
    %v334 = vunpack.c.l.b16 %v302
    %v335 = vunpack.c.l.b16 %v303
    %v336 = vunpack.c.l.b16 %v304
    %v337 = vunpack.c.l.b16 %v305
    %v338 = vunpack.c.l.b16 %v306
    %v339 = vunpack.c.l.b16 %v307
    %v340 = vpack.c.b16 %v325, %v324
    %v341 = vpack.c.b16 %v327, %v326
    %v342 = vpack.c.b16 %v329, %v328
    %v343 = vpack.c.b16 %v331, %v330
    %v344 = vpack.c.b16 %v333, %v332
    %v345 = vpack.c.b16 %v335, %v334
    %v346 = vpack.c.b16 %v337, %v336
    %v347 = vpack.c.b16 %v339, %v338
    %356 = vmatprep.subr.bf16.mxu0 0
    %357 = vmatpush1.bf16.msra.mxu0 %v340
    %358 = vmatprep.subr.bf16.mxu0 0
    %359 = vmatpush1.bf16.msra.mxu0 %v341
    %360 = vmatprep.subr.bf16.mxu0 0
    %361 = vmatpush1.bf16.msra.mxu0 %v342
    %362 = vmatprep.subr.bf16.mxu0 0
    %363 = vmatpush1.bf16.msra.mxu0 %v343
    %364 = vmatprep.subr.bf16.mxu0 0
    %365 = vmatpush1.bf16.msra.mxu0 %v344
    %366 = vmatprep.subr.bf16.mxu0 0
    %367 = vmatpush1.bf16.msra.mxu0 %v345
    %368 = vmatprep.subr.bf16.mxu0 0
    %369 = vmatpush1.bf16.msra.mxu0 %v346
    %370 = vmatprep.subr.bf16.mxu0 0
    %371 = vmatpush1.bf16.msra.mxu0 %v347
    %372 = vmatprep.subr.bf16.mxu0 0
    %373 = vmatpush1.bf16.msra.mxu0 0
    %374 = vmatprep.subr.bf16.mxu0 0
    %375 = vmatpush1.bf16.msra.mxu0 0
    %376 = vmatprep.subr.bf16.mxu0 0
    %377 = vmatpush1.bf16.msra.mxu0 0
    %378 = vmatprep.subr.bf16.mxu0 0
    %379 = vmatpush1.bf16.msra.mxu0 0
    %380 = vmatprep.subr.bf16.mxu0 0
    %381 = vmatpush1.bf16.msra.mxu0 0
    %382 = vmatprep.subr.bf16.mxu0 0
    %383 = vmatpush1.bf16.msra.mxu0 0
    %384 = vmatprep.subr.bf16.mxu0 0
    %385 = vmatpush1.bf16.msra.mxu0 0
    %386 = vmatprep.subr.bf16.mxu0 0
    %387 = vmatpush1.bf16.msra.mxu0 0
    %388 = vmatprep.mubr.bf16.mxu0 0
    %389 = vmatmul.mubr.bf16.gmra.mrb[0].mxu0 %v79
    %v390 = vpop.f32.mrb[0].mxu0
    %v391 = vadd.f32 0.0, %v390
    %v392 = vpop.f32.mrb[0].mxu0
    %v393 = vpop.f32.mrb[0].mxu0
    %v394 = vadd.f32 0.0, %v393
    %v395 = vpop.f32.mrb[0].mxu0
    %396 = vdwg.mxu0
    %v397 = vadd.f32 %v285, %v391
    %v398 = vadd.f32 %v288, %v394
    %399 = vst [vmem:[#allocation5] sm:$0xff] %v397
    %400 = vst [vmem:[#allocation5 + $0x8] sm:$0xff] %v398
    // Predicated region
    $region14: #{tpu_custom_call.1} parent=1 // pred_check
      _
    $region15: #{tpu_custom_call.1} parent=1 // pred_check_branch
      %402 = sbr.rel (0) target = $region17
    $region16: #{tpu_custom_call.1} parent=1 // pred_region
      %s404 = ssub.s32 256, 256
      %405 = vsyncadd [#allocation4], %s404
      %s406 = sshll.u32 [#allocation5], 4
      %s407 = int_to_ptr.vmem [resolvable:$true] %s406
      %412 = dma.vmem_to_hbm [thread:$0]  %s407, 256, %s2, [#allocation4], 128, 128, 8
    $region17: #{tpu_custom_call.1} parent=1 // pred_fallthru
      _
    // Predicated region
    $region18: #{tpu_custom_call.1} parent=1 // pred_check
      _
    $region19: #{tpu_custom_call.1} parent=1 // pred_check_branch
      %414 = sbr.rel (0) target = $region21
    $region20: #{tpu_custom_call.1} parent=1 // pred_region
      %415 = dma.done [#allocation4], 256
    $region21: #{tpu_custom_call.1} parent=1 // pred_fallthru
      _
    %416 = vsyncpa [#allocation3], 1
    %417 = vsyncpa [#allocation4], 1

</llo_original>
